<compile_context>
chip_gen: v6e
topology: v6e:2x2x1
jax: 0.10.0
libtpu: 0.0.40
codegen_flags: <defaults>
</compile_context>

<pallas_src>
import functools

import jax
import jax.numpy as jnp
from jax.experimental import pallas as pl
from jax.experimental.pallas import tpu as pltpu


def _focal_loss_kernel(x_ref, t_ref, a_ref, o_ref, *, gamma):
    # x_ref: (1, C, T) logits tile, t_ref: (1, 1, T) int32 targets,
    # a_ref: (C, 1) per-class alpha, o_ref: (1, 1, T) loss tile.
    x = x_ref[0].astype(jnp.float32)                      # (C, T)
    t = t_ref[0]                                          # (1, T) int32

    # Numerically stable log-sum-exp over the class (sublane) axis.
    m = jnp.max(x, axis=0, keepdims=True)                 # (1, T)
    ex = jnp.exp(x - m)                                    # (C, T)  EUP
    lse = m + jnp.log(jnp.sum(ex, axis=0, keepdims=True))  # (1, T)

    # Gather logits / alpha at the target class via a one-hot mask.
    cls = jax.lax.broadcasted_iota(jnp.int32, x.shape, 0)  # (C, T)
    onehot = (cls == t).astype(jnp.float32)                # (C, T)
    x_t = jnp.sum(x * onehot, axis=0, keepdims=True)       # (1, T)
    a_t = jnp.sum(a_ref[...] * onehot, axis=0, keepdims=True)  # (1, T)

    logpt = x_t - lse                                      # log p_target
    pt = jnp.exp(logpt)                                    # (pt uses un-weighted logpt, as in torch)
    loss = -((1.0 - pt) ** gamma) * (a_t * logpt)          # (1, T)

    o_ref[0] = loss.astype(o_ref.dtype)


def focal_loss(logits, target, gamma=2, alpha=None, tile_hw=512):
    """logits: (B, C, H, W), target: (B, H, W) ints. Returns (B, H, W) f32."""
    B, C, H, W = logits.shape
    HW = H * W

    # Per-class alpha vector (ones == no weighting), matching torch semantics.
    if alpha is None:
        alpha_vec = jnp.ones((C,), jnp.float32)
    elif isinstance(alpha, float):
        assert C == 2, "float alpha implies binary classification"
        alpha_vec = jnp.array([alpha, 1.0 - alpha], jnp.float32)
    else:
        alpha_vec = jnp.asarray(alpha, jnp.float32).reshape(C)
    alpha_col = alpha_vec.reshape(C, 1)

    # Lane tile over the flattened spatial axis (multiple of 128).
    tile = max(128, (min(tile_hw, HW) // 128) * 128)
    hw_pad = -(-HW // tile) * tile

    # Free reshapes only -- no NCHW<->NHWC transposes.
    x = logits.reshape(B, C, HW)
    t = target.reshape(B, 1, HW).astype(jnp.int32)
    if hw_pad != HW:
        x = jnp.pad(x, ((0, 0), (0, 0), (0, hw_pad - HW)))
        t = jnp.pad(t, ((0, 0), (0, 0), (0, hw_pad - HW)))  # class 0 pad (sliced off later)

    grid = (B, hw_pad // tile)

    cost = pl.CostEstimate(
        flops=8 * B * hw_pad * C,
        transcendentals=B * hw_pad * (C + 2),
        bytes_accessed=(x.size * x.dtype.itemsize + t.size * 4 + B * hw_pad * 4),
    )

    out = pl.pallas_call(
        functools.partial(_focal_loss_kernel, gamma=gamma),
        out_shape=jax.ShapeDtypeStruct((B, 1, hw_pad), jnp.float32),
        grid_spec=pltpu.PrefetchScalarGridSpec(
            num_scalar_prefetch=0,
            grid=grid,
            in_specs=[
                pl.BlockSpec((1, C, tile), lambda b, i: (b, 0, i)),  # logits
                pl.BlockSpec((1, 1, tile), lambda b, i: (b, 0, i)),  # target
                pl.BlockSpec((C, 1),       lambda b, i: (0, 0)),     # alpha
            ],
            out_specs=pl.BlockSpec((1, 1, tile), lambda b, i: (b, 0, i)),
        ),
        compiler_params=pltpu.CompilerParams(
            dimension_semantics=("parallel", "parallel")),
        cost_estimate=cost,
    )(x, t, alpha_col)

    return out.reshape(B, hw_pad)[:, :HW].reshape(B, H, W)


def _reference(logits, target, gamma=2, alpha_vec=None):
    """Pure-JAX reference matching the PyTorch FocalLoss.forward semantics."""
    B, C, H, W = logits.shape
    x = jnp.transpose(logits.reshape(B, C, H * W), (0, 2, 1)).reshape(-1, C)
    t = target.reshape(-1).astype(jnp.int32)
    logp = jax.nn.log_softmax(x, axis=1)
    logpt = jnp.take_along_axis(logp, t[:, None], axis=1)[:, 0]
    pt = jnp.exp(logpt)
    if alpha_vec is not None:
        logpt = logpt * alpha_vec[t]
    loss = -1.0 * (1.0 - pt) ** gamma * logpt
    return loss.reshape(B, H, W)


if __name__ == "__main__":
    key = jax.random.PRNGKey(0)
    kx, kt = jax.random.split(key)

    B, C, H, W = 2, 4, 16, 16
    logits = jax.random.normal(kx, (B, C, H, W), jnp.float32)
    target = jax.random.randint(kt, (B, H, W), 0, C)

    # Default module config: gamma=2, alpha=None.
    out = jax.block_until_ready(focal_loss(logits, target, gamma=2, alpha=None))
    ref = _reference(logits, target, gamma=2, alpha_vec=None)
    assert out.shape == (B, H, W)
    assert jnp.allclose(out, ref, atol=1e-5, rtol=1e-5)

    # Per-class alpha weighting path.
    alpha = jnp.array([0.25, 0.75, 0.5, 1.0], jnp.float32)
    out_a = jax.block_until_ready(focal_loss(logits, target, gamma=2, alpha=alpha))
    ref_a = _reference(logits, target, gamma=2, alpha_vec=alpha)
    assert jnp.allclose(out_a, ref_a, atol=1e-5, rtol=1e-5)

    print("KERNEL_OK")
</pallas_src>

<mosaic_0001>
module attributes {stable_mosaic.version = 11 : i64} {
  func.func @_focal_loss_kernel(%arg0: i32, %arg1: i32, %arg2: memref<1x4x256xf32, #tpu.memory_space<vmem>>, %arg3: memref<1x1x256xi32, #tpu.memory_space<vmem>>, %arg4: memref<4x1xf32, #tpu.memory_space<vmem>>, %arg5: memref<1x1x256xf32, #tpu.memory_space<vmem>>) attributes {dimension_semantics = [#tpu.dimension_semantics<parallel>, #tpu.dimension_semantics<parallel>], iteration_bounds = array<i64: 2, 1>, scalar_prefetch = 0 : i64, scratch_operands = 0 : i64, tpu.core_type = #tpu.core_type<tc>, window_params = [{transform_indices = @transform_0, window_bounds = array<i64: 1, 4, 256>}, {transform_indices = @transform_1, window_bounds = array<i64: 1, 1, 256>}, {pipeline_mode = #tpu.pipeline_mode<synchronous>, transform_indices = @transform_2, window_bounds = array<i64: 4, 1>}, {transform_indices = @transform_3, window_bounds = array<i64: 1, 1, 256>}]} {
    %c0 = arith.constant 0 : index
    %c0_0 = arith.constant 0 : index
    %c0_1 = arith.constant 0 : index
    %0 = vector.load %arg2[%c0, %c0_0, %c0_1] : memref<1x4x256xf32, #tpu.memory_space<vmem>>, vector<1x4x256xf32>
    %1 = vector.shape_cast %0 : vector<1x4x256xf32> to vector<4x256xf32>
    %c0_2 = arith.constant 0 : index
    %c0_3 = arith.constant 0 : index
    %c0_4 = arith.constant 0 : index
    %2 = vector.load %arg3[%c0_2, %c0_3, %c0_4] : memref<1x1x256xi32, #tpu.memory_space<vmem>>, vector<1x1x256xi32>
    %3 = vector.shape_cast %2 : vector<1x1x256xi32> to vector<1x256xi32>
    %cst = arith.constant dense<0xFF800000> : vector<256xf32>
    %4 = vector.multi_reduction <maximumf>, %1, %cst [0] : vector<4x256xf32> to vector<256xf32>
    %5 = vector.shape_cast %4 : vector<256xf32> to vector<1x256xf32>
    %6 = vector.broadcast %5 : vector<1x256xf32> to vector<4x256xf32>
    %7 = arith.subf %1, %6 : vector<4x256xf32>
    %8 = math.exp %7 : vector<4x256xf32>
    %cst_5 = arith.constant dense<0.000000e+00> : vector<256xf32>
    %9 = vector.multi_reduction <add>, %8, %cst_5 [0] : vector<4x256xf32> to vector<256xf32>
    %10 = vector.shape_cast %9 : vector<256xf32> to vector<1x256xf32>
    %11 = math.log %10 : vector<1x256xf32>
    %12 = arith.addf %5, %11 : vector<1x256xf32>
    %13 = tpu.iota {dimensions = array<i32: 0>} : vector<4x256xi32>
    %14 = vector.broadcast %3 : vector<1x256xi32> to vector<4x256xi32>
    %15 = arith.cmpi eq, %13, %14 : vector<4x256xi32>
    %16 = arith.extui %15 : vector<4x256xi1> to vector<4x256xi32>
    %17 = arith.sitofp %16 : vector<4x256xi32> to vector<4x256xf32>
    %18 = arith.mulf %1, %17 : vector<4x256xf32>
    %cst_6 = arith.constant dense<0.000000e+00> : vector<256xf32>
    %19 = vector.multi_reduction <add>, %18, %cst_6 [0] : vector<4x256xf32> to vector<256xf32>
    %20 = vector.shape_cast %19 : vector<256xf32> to vector<1x256xf32>
    %c0_7 = arith.constant 0 : index
    %c0_8 = arith.constant 0 : index
    %21 = vector.load %arg4[%c0_7, %c0_8] : memref<4x1xf32, #tpu.memory_space<vmem>>, vector<4x1xf32>
    %22 = vector.broadcast %21 : vector<4x1xf32> to vector<4x256xf32>
    %23 = arith.mulf %22, %17 : vector<4x256xf32>
    %cst_9 = arith.constant dense<0.000000e+00> : vector<256xf32>
    %24 = vector.multi_reduction <add>, %23, %cst_9 [0] : vector<4x256xf32> to vector<256xf32>
    %25 = vector.shape_cast %24 : vector<256xf32> to vector<1x256xf32>
    %26 = arith.subf %20, %12 : vector<1x256xf32>
    %27 = math.exp %26 : vector<1x256xf32>
    %cst_10 = arith.constant 1.000000e+00 : f32
    %28 = vector.broadcast %cst_10 : f32 to vector<1x256xf32>
    %29 = arith.subf %28, %27 : vector<1x256xf32>
    %30 = arith.mulf %29, %29 : vector<1x256xf32>
    %cst_11 = arith.constant 0.000000e+00 : f32
    %31 = vector.broadcast %cst_11 : f32 to vector<1x256xf32>
    %32 = arith.subf %31, %30 : vector<1x256xf32>
    %33 = arith.mulf %25, %26 : vector<1x256xf32>
    %34 = arith.mulf %32, %33 : vector<1x256xf32>
    %c0_12 = arith.constant 0 : index
    %c0_13 = arith.constant 0 : index
    %c0_14 = arith.constant 0 : index
    %35 = vector.load %arg5[%c0_12, %c0_13, %c0_14] : memref<1x1x256xf32, #tpu.memory_space<vmem>>, vector<1x1x256xf32>
    %36 = vector.shape_cast %35 : vector<1x1x256xf32> to vector<1x256xf32>
    %37 = vector.shape_cast %34 : vector<1x256xf32> to vector<1x1x256xf32>
    tpu.vector_store %arg5[%c0_12, %c0_13, %c0_14], %37 {strides = array<i32>} : memref<1x1x256xf32, #tpu.memory_space<vmem>>, vector<1x1x256xf32>,
    return
  }
  func.func @transform_0(%arg0: i32, %arg1: i32) -> (i32, i32, i32) {
    %c0_i32 = arith.constant 0 : i32
    %c0_i32_0 = arith.constant 0 : i32
    return %arg0, %c0_i32, %arg1 : i32, i32, i32
  }
  func.func @transform_1(%arg0: i32, %arg1: i32) -> (i32, i32, i32) {
    %c0_i32 = arith.constant 0 : i32
    %c0_i32_0 = arith.constant 0 : i32
    return %arg0, %c0_i32, %arg1 : i32, i32, i32
  }
  func.func @transform_2(%arg0: i32, %arg1: i32) -> (i32, i32) {
    %c0_i32 = arith.constant 0 : i32
    %c0_i32_0 = arith.constant 0 : i32
    %c0_i32_1 = arith.constant 0 : i32
    return %c0_i32, %c0_i32_0 : i32, i32
  }
  func.func @transform_3(%arg0: i32, %arg1: i32) -> (i32, i32, i32) {
    %c0_i32 = arith.constant 0 : i32
    %c0_i32_0 = arith.constant 0 : i32
    return %arg0, %c0_i32, %arg1 : i32, i32, i32
  }
}

</mosaic_0001>

<llo_original>
// kernel: tpu_custom_call.1
$region0: #{tpu_custom_call.1}
  #allocation0 [shape = 'u32[]', space=smem, size = 0x4, offset = 0x4, fixed_abs, tag = 'smem constant byte address 0x4 - core index']
  #allocation1 [shape = 'u32[144,128]{1,0:T(1,128)}', space=vmem, size = 0x12000, scoped, tag = 'internal scratch']
  %s0 = inlined_call_operand.hbm [shape: f32[2,4,256], index: 0, kind: input, shape index: {}]
  %s1 = inlined_call_operand.vmem [shape: s32[2,1,256], index: 1, kind: input, shape index: {}]
  %s2 = inlined_call_operand.vmem [shape: f32[4,1], index: 2, kind: input, shape index: {}]
  %s3 = inlined_call_operand.hbm [shape: f32[2,1,256], index: 3, kind: output, shape index: {}]
  %s4 = sld [smem:[#allocation0]]
  $region49: #{tpu_custom_call.1} parent=0
    _
  %s6 = ssub.s32 1, %s4
  %s7 = scalar_select 0, %s6, %s4
  $region1: #{tpu_custom_call.1} parent=0
    #allocation2 [shape = 'u8[8192]{0}', space=vmem, size = 0x2000, scoped, tag = 'input window, operand 0']
    #allocation3 [shape = 's32[2]{0}', space=sflag, size = 0x8, scoped, tag = 'scoped memory for tpu_custom_call.1']
    #allocation4 [shape = 's32[2]{0}', space=sflag, size = 0x8, scoped, tag = 'scoped memory for tpu_custom_call.1']
    #allocation5 [shape = 'u8[2048]{0}', space=vmem, size = 0x800, scoped, tag = 'output window, operand 0']
    %8 = vsyncpa [#allocation3], 0
    %s9 = scalar_lea.sflag [#allocation3], 1
    %10 = vsyncpa %s9, 0
    %11 = vsyncpa [#allocation4], 0
    %s12 = scalar_lea.sflag [#allocation4], 1
    %13 = vsyncpa %s12, 0
    loop: start=0, step=1, limit=4
    $region2: #{tpu_custom_call.1} parent=1 // loop_pre_header
      _
    $region3: #{tpu_custom_call.1} parent=1 // loop_header
      %s15 = sphi 0, %s19
      %p16 = scmp.ge.s32.totalorder %s15, 4
      %s22 = sphi 0, %s34
      %s23 = sphi 0, %s30
      %s24 = sphi 0, %s22
      %s25 = sphi 0, %s23
      %s26 = sphi 0, %s24
      %s27 = sphi 0, %s25
      %s39 = sphi 0, %s41
      %s42 = sphi 0, %s39
      %s43 = sphi 0, %s42
      %s59 = sphi 0, %s43
      %s67 = sphi 0, %s69
      %s70 = sphi 0, %s67
      %s71 = sphi 0, %s70
      %s87 = sphi 0, %s71
      %s91 = sphi 0, %s91
      %s93 = sphi 0, %s91
      %s94 = sphi 0, %s93
      %s108 = sphi 0, %s94
      %s116 = sphi 0, %s118
      %s119 = sphi 0, %s116
      %s120 = sphi 0, %s119
      %s136 = sphi 0, %s120
    $region4: #{tpu_custom_call.1} parent=1 // loop_header_branch
      %18 = sbr.rel (%p16) target = $region8
    $region5: #{tpu_custom_call.1} parent=1 // loop_body
      %s20 = ssub.s32 %s15, 1
      %s21 = ssub.s32 %s15, 2
      %s28 = sadd.s32 1, %s23
      %p29 = scmp.ge.s32.totalorder %s28, 1
      %s30 = scalar_select %p29, 0, %s28
      %s31 = sadd.s32 1, %s22
      %s32 = scalar_select %p29, %s31, %s22
      %p33 = scmp.ge.s32.totalorder %s32, 2
      %s34 = scalar_select %p33, 0, %s32
      %s35 = ssub.s32 %s22, %s34
      %s36 = ssub.s32 %s23, %s30
      %s37 = sor.u32 %s35, %s36
      %p38 = scmp.eq.s32.totalorder %s37, 0
      %s40 = sadd.s32 %s39, 1
      %s41 = scalar_select %p38, %s39, %s40
      %p44 = pneg %p38
      %p45 = scmp.eq.s32.totalorder %s15, 1
      %p46 = por %p44, %p45
      %p47 = scmp.ne.s32.totalorder %s39, %s42
      %p48 = scmp.eq.s32.totalorder %s15, 0
      %p49 = por %p47, %p48
      %p50 = scmp.ne.s32.totalorder %s39, %s42
      %p51 = scmp.eq.s32.totalorder %s20, 1
      %p52 = por %p50, %p51
      %p53 = scmp.ne.s32.totalorder %s42, %s43
      %p54 = scmp.eq.s32.totalorder %s20, 0
      %p55 = por %p53, %p54
      %p56 = scmp.ne.s32.totalorder %s42, %s43
      %p57 = scmp.eq.s32.totalorder %s21, 1
      %p58 = por %p56, %p57
      %p60 = scmp.ne.s32.totalorder %s43, %s59
      %p61 = scmp.eq.s32.totalorder %s21, 0
      %p62 = por %p60, %p61
      %s63 = ssub.s32 %s22, %s34
      %s64 = ssub.s32 %s23, %s30
      %s65 = sor.u32 %s63, %s64
      %p66 = scmp.eq.s32.totalorder %s65, 0
      %s68 = sadd.s32 %s67, 1
      %s69 = scalar_select %p66, %s67, %s68
      %p72 = pneg %p66
      %p73 = scmp.eq.s32.totalorder %s15, 1
      %p74 = por %p72, %p73
      %p75 = scmp.ne.s32.totalorder %s67, %s70
      %p76 = scmp.eq.s32.totalorder %s15, 0
      %p77 = por %p75, %p76
      %p78 = scmp.ne.s32.totalorder %s67, %s70
      %p79 = scmp.eq.s32.totalorder %s20, 1
      %p80 = por %p78, %p79
      %p81 = scmp.ne.s32.totalorder %s70, %s71
      %p82 = scmp.eq.s32.totalorder %s20, 0
      %p83 = por %p81, %p82
      %p84 = scmp.ne.s32.totalorder %s70, %s71
      %p85 = scmp.eq.s32.totalorder %s21, 1
      %p86 = por %p84, %p85
      %p88 = scmp.ne.s32.totalorder %s71, %s87
      %p89 = scmp.eq.s32.totalorder %s21, 0
      %p90 = por %p88, %p89
      %s92 = sadd.s32 %s91, 1
      %p95 = scmp.eq.s32.totalorder %s15, 1
      %p96 = scmp.ne.s32.totalorder %s91, %s93
      %p97 = scmp.eq.s32.totalorder %s15, 0
      %p98 = por %p96, %p97
      %p99 = scmp.ne.s32.totalorder %s91, %s93
      %p100 = scmp.eq.s32.totalorder %s20, 1
      %p101 = por %p99, %p100
      %p102 = scmp.ne.s32.totalorder %s93, %s94
      %p103 = scmp.eq.s32.totalorder %s20, 0
      %p104 = por %p102, %p103
      %p105 = scmp.ne.s32.totalorder %s93, %s94
      %p106 = scmp.eq.s32.totalorder %s21, 1
      %p107 = por %p105, %p106
      %p109 = scmp.ne.s32.totalorder %s94, %s108
      %p110 = scmp.eq.s32.totalorder %s21, 0
      %p111 = por %p109, %p110
      %s112 = ssub.s32 %s22, %s34
      %s113 = ssub.s32 %s23, %s30
      %s114 = sor.u32 %s112, %s113
      %p115 = scmp.eq.s32.totalorder %s114, 0
      %s117 = sadd.s32 %s116, 1
      %s118 = scalar_select %p115, %s116, %s117
      %p121 = pneg %p115
      %p122 = scmp.eq.s32.totalorder %s15, 1
      %p123 = por %p121, %p122
      %p124 = scmp.ne.s32.totalorder %s116, %s119
      %p125 = scmp.eq.s32.totalorder %s15, 0
      %p126 = por %p124, %p125
      %p127 = scmp.ne.s32.totalorder %s116, %s119
      %p128 = scmp.eq.s32.totalorder %s20, 1
      %p129 = por %p127, %p128
      %p130 = scmp.ne.s32.totalorder %s119, %s120
      %p131 = scmp.eq.s32.totalorder %s20, 0
      %p132 = por %p130, %p131
      %p133 = scmp.ne.s32.totalorder %s119, %s120
      %p134 = scmp.eq.s32.totalorder %s21, 1
      %p135 = por %p133, %p134
      %p137 = scmp.ne.s32.totalorder %s120, %s136
      %p138 = scmp.eq.s32.totalorder %s21, 0
      %p139 = por %p137, %p138
      %p140 = scmp.le.s32.totalorder 1, %s15
      %p141 = scmp.lt.s32.totalorder %s15, 3
      %p142 = pnand %p140, %p141
      %p143 = pneg %p142
      // Predicated region
      $region9: #{tpu_custom_call.1} parent=5 // pred_check
        _
      $region10: #{tpu_custom_call.1} parent=5 // pred_check_branch
        %145 = sbr.rel (%p142) target = $region12
      $region11: #{tpu_custom_call.1} parent=5 // pred_region
        %s146 = ssub.s32 %s15, 1
        // Predicated region
        $region13: #{tpu_custom_call.1} parent=11 // pred_check
          %p147 = pneg %p104
        $region14: #{tpu_custom_call.1} parent=11 // pred_check_branch
          %149 = sbr.rel (%p147) target = $region16
        $region15: #{tpu_custom_call.1} parent=11 // pred_region
          _
        $region16: #{tpu_custom_call.1} parent=11 // pred_fallthru
          _
      $region12: #{tpu_custom_call.1} parent=5 // pred_fallthru
        _
      %p150 = scmp.lt.s32.totalorder %s15, 2
      // Predicated region
      $region17: #{tpu_custom_call.1} parent=5 // pred_check
        %p151 = pneg %p150
      $region18: #{tpu_custom_call.1} parent=5 // pred_check_branch
        %153 = sbr.rel (%p151) target = $region20
      $region19: #{tpu_custom_call.1} parent=5 // pred_region
        // Predicated region
        $region21: #{tpu_custom_call.1} parent=19 // pred_check
          %p154 = pneg %p49
        $region22: #{tpu_custom_call.1} parent=19 // pred_check_branch
          %156 = sbr.rel (%p154) target = $region24
        $region23: #{tpu_custom_call.1} parent=19 // pred_region
          %s157 = sand.u32 %s39, 1
          %s158 = scalar_lea.sflag [#allocation3], %s157
          %s159 = sand.u32 %s39, 1
          %s160 = smul.addr %s159, 8
          %s161 = scalar_lea.vmem [#allocation2], %s160
          %s162 = smul.u32 2, %s23
          %s164 = ssub.s32 128, 128
          %165 = vsyncadd %s158, %s164
          %s166 = smul.addr %s22, 2
          %s167 = sadd.s32 %s162, %s166
          %s168 = smul.addr %s167, 64
          %s169 = scalar_lea.hbm %s0, %s168
          %s171 = sshll.u32 %s161, 4
          %s172 = int_to_ptr.vmem [resolvable:$true] %s171
          %174 = dma.hbm_to_vmem [thread:$0]  %s169, 128, %s172, %s158
        $region24: #{tpu_custom_call.1} parent=19 // pred_fallthru
          _
        // Predicated region
        $region25: #{tpu_custom_call.1} parent=19 // pred_check
          %p175 = pneg %p77
        $region26: #{tpu_custom_call.1} parent=19 // pred_check_branch
          %177 = sbr.rel (%p175) target = $region28
        $region27: #{tpu_custom_call.1} parent=19 // pred_region
          %s178 = smul.u32 2, %s23
          %p179 = scmp.lt.s32.totalorder %s22, 1
          %s180 = scalar_select %p179, %s22, 1
          %p181 = scmp.lt.s32.totalorder %s178, 1
          %s182 = scalar_select %p181, %s178, 1
          %s183 = smul.addr %s180, 2
          %s184 = sadd.s32 %s182, %s183
          %s185 = scalar_lea.vmem %s1, %s184
          %s186 = smul.u32 2, %s23
        $region28: #{tpu_custom_call.1} parent=19 // pred_fallthru
          _
      $region20: #{tpu_custom_call.1} parent=5 // pred_fallthru
        _
      %p187 = scmp.le.s32.totalorder 1, %s15
      %p188 = scmp.lt.s32.totalorder %s15, 3
      %p189 = pnand %p187, %p188
      %p190 = pneg %p189
      // Predicated region
      $region29: #{tpu_custom_call.1} parent=5 // pred_check
        _
      $region30: #{tpu_custom_call.1} parent=5 // pred_check_branch
        %192 = sbr.rel (%p189) target = $region32
      $region31: #{tpu_custom_call.1} parent=5 // pred_region
        %s193 = ssub.s32 %s15, 1
        %s194 = sand.u32 %s42, 1
        %s195 = scalar_lea.sflag [#allocation3], %s194
        %s196 = sand.u32 %s42, 1
        %s197 = smul.addr %s196, 8
        %s198 = scalar_lea.vmem [#allocation2], %s197
        // Predicated region
        $region33: #{tpu_custom_call.1} parent=31 // pred_check
          %p199 = pneg %p55
        $region34: #{tpu_custom_call.1} parent=31 // pred_check_branch
          %201 = sbr.rel (%p199) target = $region36
        $region35: #{tpu_custom_call.1} parent=31 // pred_region
          %202 = dma.done %s195, 128
        $region36: #{tpu_custom_call.1} parent=31 // pred_fallthru
          _
        %s203 = sand.u32 %s42, 1
        %s204 = scalar_lea.sflag [#allocation3], %s203
        %s205 = sand.u32 %s42, 1
        %s206 = smul.addr %s205, 8
        %s207 = scalar_lea.vmem [#allocation2], %s206
        %p208 = pneg %p55
        %p209 = pneg %p52
        %s210 = smul.u32 2, %s25
        %p211 = scmp.lt.s32.totalorder %s24, 1
        %s212 = scalar_select %p211, %s24, 1
        %p213 = scmp.lt.s32.totalorder %s210, 1
        %s214 = scalar_select %p213, %s210, 1
        %s215 = smul.addr %s212, 2
        %s216 = sadd.s32 %s214, %s215
        %s217 = scalar_lea.vmem %s1, %s216
        %p218 = pneg %p83
        %p219 = pneg %p80
        %p220 = pneg %p104
        %p221 = pneg %p101
        %p222 = pneg %p132
        %p223 = pneg %p129
        %s224 = sand.u32 %s119, 1
        %s225 = scalar_lea.sflag [#allocation4], %s224
        %s226 = sand.u32 %s119, 1
        %s227 = smul.addr %s226, 2
        %s228 = scalar_lea.vmem [#allocation5], %s227
        %s229 = smul.u32 2, %s25
        %s230 = smul.u32 2, %s25
        %p231 = scmp.lt.s32.totalorder %s24, 1
        %s232 = scalar_select %p231, %s24, 1
        %p233 = scmp.lt.s32.totalorder %s230, 1
        %s234 = scalar_select %p233, %s230, 1
        %s235 = smul.addr %s232, 2
        %s236 = sadd.s32 %s234, %s235
        %s237 = scalar_lea.vmem %s1, %s236
        %s238 = smul.u32 2, %s25
        %s239 = smul.u32 2, %s25
        %v240 = vld [vmem:[%s198] sm:$0xff]
        %v241 = vld [vmem:[%s237] sm:$0x3]
        %v243 = vcombine.high %v240, %v240
        %vm245 = vcmask 1043456
        %v246 = vsel %vm245, %v240, -inf
        %v247 = vrot.slane %v246, 4
        %v248 = vmax.f32 %v246, %v247
        %v249 = vrot.slane %v248, 2
        %v250 = vmax.f32 %v248, %v249
        %v251 = vrot.slane %v250, 1
        %v252 = vmax.f32 %v250, %v251
        %v253 = vsel %vm245, %v243, -inf
        %v254 = vrot.slane %v253, 4
        %v255 = vmax.f32 %v253, %v254
        %v256 = vrot.slane %v255, 2
        %v257 = vmax.f32 %v255, %v256
        %v258 = vrot.slane %v257, 1
        %v259 = vmax.f32 %v257, %v258
        %v262 = vcombine.low %v252, %v259
        %v264 = vsub.f32 %v240, %v262
        %v265 = vmul.f32 %v264, 1.442695
        %v266 = vpow.pop %v265
        %v268 = vcombine.high %v266, %v266
        %v270 = vsel %vm245, %v266, 0.0
        %v271 = vrot.slane %v270, 4
        %v272 = vadd.f32 %v270, %v271
        %v273 = vrot.slane %v272, 2
        %v274 = vadd.f32 %v272, %v273
        %v275 = vrot.slane %v274, 1
        %v276 = vadd.f32 %v274, %v275
        %v277 = vsel %vm245, %v268, 0.0
        %v278 = vrot.slane %v277, 4
        %v279 = vadd.f32 %v277, %v278
        %v280 = vrot.slane %v279, 2
        %v281 = vadd.f32 %v279, %v280
        %v282 = vrot.slane %v281, 1
        %v283 = vadd.f32 %v281, %v282
        %v284 = vlog2.pop %v276
        %v285 = vmul.f32 %v284, 0.6931472
        %v286 = vlog2.pop %v283
        %v287 = vmul.f32 %v286, 0.6931472
        %v288 = vadd.f32 %v252, %v285
        %v289 = vadd.f32 %v259, %v287
        %v290 = vlaneseq
        %v291 = vshrl.u32 %v290, 7
        %v292 = vlaneseq
        %v293 = vshrl.u32 %v292, 7
        %v294 = vsub.s32 0, %v293
        %v295 = vrot.slane %v241, %v294
        %v296 = vlaneseq
        %v297 = vshrl.u32 %v296, 7
        %v298 = vsub.s32 1, %v297
        %v299 = vrot.slane %v241, %v298
        %vm300 = vcmp.eq.s32.totalorder %v291, %v295
        %vm301 = vcmp.eq.s32.totalorder %v291, %v299
        %v302 = vsel %vm300, 1, 0
        %v303 = vsel %vm301, 1, 0
        %v304 = vcvt.s32.f32 %v302
        %v305 = vcvt.s32.f32 %v303
        %v308 = vcombine.low %v304, %v305
        %v310 = vmul.f32 %v240, %v308
        %v312 = vcombine.high %v310, %v310
        %v314 = vsel %vm245, %v310, 0.0
        %v315 = vrot.slane %v314, 4
        %v316 = vadd.f32 %v314, %v315
        %v317 = vrot.slane %v316, 2
        %v318 = vadd.f32 %v316, %v317
        %v319 = vrot.slane %v318, 1
        %v320 = vadd.f32 %v318, %v319
        %v321 = vsel %vm245, %v312, 0.0
        %v322 = vrot.slane %v321, 4
        %v323 = vadd.f32 %v321, %v322
        %v324 = vrot.slane %v323, 2
        %v325 = vadd.f32 %v323, %v324
        %v326 = vrot.slane %v325, 1
        %v327 = vadd.f32 %v325, %v326
        %v328 = vld [vmem:[%s2] sm:$0xf]
        %330 = vset.pattern.permute.xlu0 0
        %331 = vperm.xlu0 %330, %v328
        %v332 = vpop.permute.xlu0 %331
        %v334 = vmul.f32 %v332, %v304
        %v335 = vmul.f32 %v332, %v305
        %v336 = vsel %vm245, %v334, 0.0
        %v337 = vrot.slane %v336, 4
        %v338 = vadd.f32 %v336, %v337
        %v339 = vrot.slane %v338, 2
        %v340 = vadd.f32 %v338, %v339
        %v341 = vrot.slane %v340, 1
        %v342 = vadd.f32 %v340, %v341
        %v343 = vsel %vm245, %v335, 0.0
        %v344 = vrot.slane %v343, 4
        %v345 = vadd.f32 %v343, %v344
        %v346 = vrot.slane %v345, 2
        %v347 = vadd.f32 %v345, %v346
        %v348 = vrot.slane %v347, 1
        %v349 = vadd.f32 %v347, %v348
        %v350 = vsub.f32 %v320, %v288
        %v351 = vsub.f32 %v327, %v289
        %v352 = vmul.f32 %v350, 1.442695
        %v353 = vpow.pop %v352
        %v354 = vmul.f32 %v351, 1.442695
        %v355 = vpow.pop %v354
        %v356 = vsub.f32 1.0, %v353
        %v357 = vsub.f32 1.0, %v355
        %v358 = vmul.f32 %v356, %v356
        %v359 = vmul.f32 %v357, %v357
        %v360 = vsub.f32 0.0, %v358
        %v361 = vsub.f32 0.0, %v359
        %v362 = vmul.f32 %v342, %v350
        %v363 = vmul.f32 %v349, %v351
        %v364 = vmul.f32 %v360, %v362
        %v365 = vmul.f32 %v361, %v363
        %v368 = vcombine.low %v364, %v365
        %v370 = vunpack.c.l.s4 1966171168
        %v371 = vunpack.c.0.s8 %v370
        %v372 = vlaneseq
        %v373 = vshrl.u32 %v372, 7
        %v374 = vsub.s32 %v371, %v373
        %v375 = vrot.slane %v368, %v374
        %v377 = vunpack.c.l.s4 1966171168
        %v378 = vunpack.c.0.s8 %v377
        %v379 = vlaneseq
        %v380 = vshrl.u32 %v379, 7
        %v381 = vsub.s32 %v378, %v380
        %v382 = vrot.slane %v375, %v381
        %v384 = vlaneseq
        %vm385 = vcmp.ge.s32.totalorder %v384, 0
        %vm386 = vcmp.lt.s32.totalorder %v384, 256
        %vm387 = vmand %vm385, %vm386
        %388 = vst.msk [vmem:[%s228] sm:$0x3] %vm387, %v382
        %s389 = sand.u32 %s119, 1
        %s390 = scalar_lea.sflag [#allocation4], %s389
        %s391 = sand.u32 %s119, 1
        %s392 = smul.addr %s391, 2
        %s393 = scalar_lea.vmem [#allocation5], %s392
        // Predicated region
        $region37: #{tpu_custom_call.1} parent=31 // pred_check
          %p394 = pneg %p129
        $region38: #{tpu_custom_call.1} parent=31 // pred_check_branch
          %396 = sbr.rel (%p394) target = $region40
        $region39: #{tpu_custom_call.1} parent=31 // pred_region
          %s397 = smul.u32 2, %s25
          %s399 = ssub.s32 32, 32
          %400 = vsyncadd %s390, %s399
          %s401 = smul.addr %s24, 2
          %s402 = sadd.s32 %s397, %s401
          %s403 = smul.addr %s402, 16
          %s404 = scalar_lea.hbm %s3, %s403
          %s406 = sshll.u32 %s393, 4
          %s407 = int_to_ptr.vmem [resolvable:$true] %s406
          %409 = dma.vmem_to_hbm [thread:$0]  %s407, 32, %s404, %s390
        $region40: #{tpu_custom_call.1} parent=31 // pred_fallthru
          _
      $region32: #{tpu_custom_call.1} parent=5 // pred_fallthru
        _
      %p410 = scmp.le.s32.totalorder 2, %s15
      // Predicated region
      $region41: #{tpu_custom_call.1} parent=5 // pred_check
        %p411 = pneg %p410
      $region42: #{tpu_custom_call.1} parent=5 // pred_check_branch
        %413 = sbr.rel (%p411) target = $region44
      $region43: #{tpu_custom_call.1} parent=5 // pred_region
        %s414 = ssub.s32 %s15, 2
        // Predicated region
        $region45: #{tpu_custom_call.1} parent=43 // pred_check
          %p415 = pneg %p135
        $region46: #{tpu_custom_call.1} parent=43 // pred_check_branch
          %417 = sbr.rel (%p415) target = $region48
        $region47: #{tpu_custom_call.1} parent=43 // pred_region
          %s418 = sand.u32 %s120, 1
          %s419 = scalar_lea.sflag [#allocation4], %s418
          %s420 = sand.u32 %s120, 1
          %s421 = smul.addr %s420, 2
          %s422 = scalar_lea.vmem [#allocation5], %s421
          %423 = dma.done %s419, 32
        $region48: #{tpu_custom_call.1} parent=43 // pred_fallthru
          _
      $region44: #{tpu_custom_call.1} parent=5 // pred_fallthru
        _
    $region6: #{tpu_custom_call.1} parent=1 // loop_footer
      %s19 = sadd.s32 1, %s15
    $region7: #{tpu_custom_call.1} parent=1 // loop_footer_branch
      %14 = sbr.rel target = $region3
    $region8: #{tpu_custom_call.1} parent=1 // loop_exit
      _
    %424 = vsyncpa [#allocation3], 1
    %s425 = scalar_lea.sflag [#allocation3], 1
    %426 = vsyncpa %s425, 1
    %427 = vsyncpa [#allocation4], 1
    %s428 = scalar_lea.sflag [#allocation4], 1
    %429 = vsyncpa %s428, 1

</llo_original>
